<compile_context>
chip_gen: v5e
topology: v5e:2x2
jax: 0.10.0
libtpu: 0.0.40
codegen_flags: <defaults>
</compile_context>

<pallas_src>
import functools

import jax
import jax.numpy as jnp
from jax import lax
from jax.experimental import pallas as pl
from jax.experimental.pallas import tpu as pltpu


def _round_up(x, m):
    return ((x + m - 1) // m) * m


def ngram_kernel(ids_ref, ew1_ref, b1_ref, w2_ref, b2_ref, out_ref,
                 *, context_size, vocab_pad):
    """One batch tile: ids (TB, C) int32 -> log-probs (TB, Vp) f32."""
    tb = ids_ref.shape[0]
    k_total = ew1_ref.shape[0]                     # C * Vp

    ids = ids_ref[...]                             # (TB, C) int32

    # Stacked one-hot over all context positions: column c*Vp + ids[:, c] is 1.
    # (Out-of-range / negative ids yield an all-zero row -> zero embedding.)
    col_ids = lax.broadcasted_iota(jnp.int32, (tb, k_total), 1)
    onehot = jnp.zeros((tb, k_total), jnp.float32)
    for c in range(context_size):                  # C is small & static
        onehot = onehot + (
            col_ids == ids[:, c:c + 1] + c * vocab_pad).astype(jnp.float32)

    # linear1 with the embedding folded in: h = onehot @ EW1  (single MXU matmul).
    h = jnp.dot(onehot.astype(ew1_ref.dtype), ew1_ref[...],
                preferred_element_type=jnp.float32)            # (TB, H)
    h = jnp.maximum(h + b1_ref[...], 0.0)                      # bias + ReLU, f32 VPU

    # linear2 (MXU); padded vocab columns carry a -1e30 bias -> vanish in softmax.
    logits = jnp.dot(h.astype(w2_ref.dtype), w2_ref[...],
                     preferred_element_type=jnp.float32)       # (TB, Vp)
    logits = logits + b2_ref[...]

    # Numerically stable log_softmax over the lane-dense (padded) vocab axis.
    m = jnp.max(logits, axis=1, keepdims=True)
    lse = m + jnp.log(jnp.sum(jnp.exp(logits - m), axis=1, keepdims=True))
    out_ref[...] = (logits - lse).astype(out_ref.dtype)


def prepare_params(emb, w1, b1, w2, b2, *, context_size):
    """One-time fold / pad of torch-layout parameters.

    torch layouts: emb (V, D), w1 (H, C*D), b1 (H,), w2 (V, H), b2 (V,).
    Returns:
      ew1_p (C*Vp, H) bf16 -- embedding folded into linear1, stacked over context
      b1_p  (1, H)    f32
      w2_p  (H, Vp)   bf16 -- transposed, vocab-padded with zeros
      b2_p  (1, Vp)   f32  -- padded columns set to -1e30 (softmax mask baked in)
      vocab, vp
    """
    vocab, d = emb.shape
    hidden = w1.shape[0]
    c = context_size
    assert w1.shape == (hidden, c * d) and w2.shape == (vocab, hidden)

    vp = _round_up(vocab, 128)
    emb_p = jnp.zeros((vp, d), jnp.float32).at[:vocab].set(emb)

    # x @ W1.T == sum_c emb[ids[:, c]] @ W1_c.T  with  W1_c = w1[:, c*D:(c+1)*D]
    # Fold offline: EW1_c = emb_p @ W1_c.T -> (Vp, H); stack along K -> (C*Vp, H).
    parts = []
    for ci in range(c):
        w1_c = w1[:, ci * d:(ci + 1) * d]                          # (H, D)
        parts.append(jnp.dot(emb_p, w1_c.T,
                             precision=lax.Precision.HIGHEST))     # (Vp, H)
    ew1_p = jnp.concatenate(parts, axis=0).astype(jnp.bfloat16)    # (C*Vp, H)

    b1_p = b1.reshape(1, hidden).astype(jnp.float32)
    w2_p = (jnp.zeros((hidden, vp), jnp.float32)
            .at[:, :vocab].set(w2.T).astype(jnp.bfloat16))
    b2_p = (jnp.full((1, vp), -1e30, jnp.float32)
            .at[:, :vocab].set(b2.reshape(1, vocab).astype(jnp.float32)))
    return ew1_p, b1_p, w2_p, b2_p, vocab, vp


def ngram_log_probs(ids, emb, w1, b1, w2, b2, *, block_b=512):
    """Batched forward: ids (B, C) int32 -> (B, vocab) f32 log-probs.

    Row i equals NGramLanguageModeler.forward(ids[i]) of the PyTorch module.
    block_b: max batch-tile rows (512 default; per-grid-step overhead dominates
    this tiny per-tile compute, so fewer/larger tiles win).
    """
    b, c = ids.shape
    ew1_p, b1_p, w2_p, b2_p, vocab, vp = prepare_params(
        emb, w1, b1, w2, b2, context_size=c)
    hidden = w2_p.shape[0]

    # Even-ish batch tiles, >=8 sublanes, <8 rows of padding waste per tile.
    n_tiles = pl.cdiv(b, block_b)
    tb = _round_up(pl.cdiv(b, n_tiles), 8)
    bp = _round_up(b, tb)
    ids_p = jnp.zeros((bp, c), jnp.int32).at[:b].set(ids.astype(jnp.int32))

    kernel = functools.partial(ngram_kernel, context_size=c, vocab_pad=vp)

    grid_spec = pltpu.PrefetchScalarGridSpec(
        num_scalar_prefetch=0,
        grid=(bp // tb,),
        in_specs=[
            pl.BlockSpec((tb, c), lambda i: (i, 0)),            # ids: tiled over batch
            pl.BlockSpec((c * vp, hidden), lambda i: (0, 0)),   # EW1 (C*Vp, H): resident
            pl.BlockSpec((1, hidden), lambda i: (0, 0)),        # b1
            pl.BlockSpec((hidden, vp), lambda i: (0, 0)),       # W2 (H, Vp): resident
            pl.BlockSpec((1, vp), lambda i: (0, 0)),            # b2 (mask baked in)
        ],
        out_specs=pl.BlockSpec((tb, vp), lambda i: (i, 0)),     # lane-dense store
    )

    out = pl.pallas_call(
        kernel,
        out_shape=jax.ShapeDtypeStruct((bp, vp), jnp.float32),
        grid_spec=grid_spec,
        compiler_params=pltpu.CompilerParams(
            dimension_semantics=("parallel",),   # batch tiles independent (v7x 2 TCs)
            vmem_limit_bytes=48 * 1024 * 1024,   # fits v7x 64 MiB; ample on v5e/v6e
        ),
    )(ids_p, ew1_p, b1_p, w2_p, b2_p)
    return out[:b, :vocab]


def ngram_forward(inputs, emb, w1, b1, w2, b2):
    """Exact analogue of NGramLanguageModeler.forward: (C,) ids -> (1, vocab)."""
    return ngram_log_probs(inputs[None, :], emb, w1, b1, w2, b2)


if __name__ == "__main__":
    vocab_size, embed_dim, context_size, hidden = 100, 16, 2, 128
    batch = 20

    key = jax.random.PRNGKey(0)
    k1, k2, k3, k4, k5, k6 = jax.random.split(key, 6)

    # torch-layout parameters (nn.Embedding / nn.Linear shapes).
    emb = jax.random.normal(k1, (vocab_size, embed_dim), jnp.float32)
    w1 = jax.random.normal(k2, (hidden, context_size * embed_dim), jnp.float32) * 0.1
    b1 = jax.random.normal(k3, (hidden,), jnp.float32) * 0.1
    w2 = jax.random.normal(k4, (vocab_size, hidden), jnp.float32) * 0.1
    b2 = jax.random.normal(k5, (vocab_size,), jnp.float32) * 0.1

    ids = jax.random.randint(k6, (batch, context_size), 0, vocab_size, jnp.int32)

    # block_b=8 forces a multi-tile batch grid (3 tiles) to exercise the tiling
    # + padded-row path at demo scale; production default is block_b=512.
    fwd = jax.jit(functools.partial(ngram_log_probs, block_b=8))
    out = jax.block_until_ready(fwd(ids, emb, w1, b1, w2, b2))
    single = jax.block_until_ready(ngram_forward(ids[0], emb, w1, b1, w2, b2))

    # Pure-JAX reference (same math as the PyTorch module, batched over rows).
    x_ref = emb[ids].reshape(batch, -1)
    h_ref = jnp.maximum(x_ref @ w1.T + b1, 0.0)
    ref = jax.nn.log_softmax(h_ref @ w2.T + b2, axis=1)

    assert out.shape == (batch, vocab_size)
    assert single.shape == (1, vocab_size)
    # Kernel uses bf16 MXU operands (same as the MXU's default bf16 pass on f32),
    # so allow a modest tolerance vs. the f32 reference.
    assert jnp.allclose(out, ref, atol=5e-2, rtol=5e-2), "batched kernel mismatch"
    assert jnp.allclose(single, ref[:1], atol=5e-2, rtol=5e-2), "single-context mismatch"
    print("KERNEL_OK")
</pallas_src>

<mosaic_0001>
module attributes {stable_mosaic.version = 11 : i64} {
  func.func @ngram_kernel(%arg0: i32, %arg1: memref<8x2xi32, #tpu.memory_space<vmem>>, %arg2: memref<256x128xbf16, #tpu.memory_space<vmem>>, %arg3: memref<1x128xf32, #tpu.memory_space<vmem>>, %arg4: memref<128x128xbf16, #tpu.memory_space<vmem>>, %arg5: memref<1x128xf32, #tpu.memory_space<vmem>>, %arg6: memref<8x128xf32, #tpu.memory_space<vmem>>) attributes {dimension_semantics = [#tpu.dimension_semantics<parallel>], iteration_bounds = array<i64: 3>, scalar_prefetch = 0 : i64, scratch_operands = 0 : i64, tpu.core_type = #tpu.core_type<tc>, window_params = [{transform_indices = @transform_0, window_bounds = array<i64: 8, 2>}, {pipeline_mode = #tpu.pipeline_mode<synchronous>, transform_indices = @transform_1, window_bounds = array<i64: 256, 128>}, {pipeline_mode = #tpu.pipeline_mode<synchronous>, transform_indices = @transform_2, window_bounds = array<i64: 1, 128>}, {pipeline_mode = #tpu.pipeline_mode<synchronous>, transform_indices = @transform_3, window_bounds = array<i64: 128, 128>}, {pipeline_mode = #tpu.pipeline_mode<synchronous>, transform_indices = @transform_4, window_bounds = array<i64: 1, 128>}, {transform_indices = @transform_5, window_bounds = array<i64: 8, 128>}]} {
    %c0 = arith.constant 0 : index
    %c0_0 = arith.constant 0 : index
    %0 = vector.load %arg1[%c0, %c0_0] : memref<8x2xi32, #tpu.memory_space<vmem>>, vector<8x2xi32>
    %1 = tpu.iota {dimensions = array<i32: 1>} : vector<8x256xi32>
    %cst = arith.constant 0.000000e+00 : f32
    %2 = vector.broadcast %cst : f32 to vector<8x256xf32>
    %3 = vector.extract_strided_slice %0 {offsets = [0, 0], sizes = [8, 1], strides = [1, 1]} : vector<8x2xi32> to vector<8x1xi32>
    %c0_i32 = arith.constant 0 : i32
    %4 = vector.broadcast %c0_i32 : i32 to vector<8x1xi32>
    %5 = arith.addi %3, %4 : vector<8x1xi32>
    %6 = vector.broadcast %5 : vector<8x1xi32> to vector<8x256xi32>
    %7 = arith.cmpi eq, %1, %6 : vector<8x256xi32>
    %8 = arith.extui %7 : vector<8x256xi1> to vector<8x256xi32>
    %9 = arith.sitofp %8 : vector<8x256xi32> to vector<8x256xf32>
    %10 = arith.addf %2, %9 : vector<8x256xf32>
    %11 = vector.extract_strided_slice %0 {offsets = [0, 1], sizes = [8, 1], strides = [1, 1]} : vector<8x2xi32> to vector<8x1xi32>
    %c128_i32 = arith.constant 128 : i32
    %12 = vector.broadcast %c128_i32 : i32 to vector<8x1xi32>
    %13 = arith.addi %11, %12 : vector<8x1xi32>
    %14 = vector.broadcast %13 : vector<8x1xi32> to vector<8x256xi32>
    %15 = arith.cmpi eq, %1, %14 : vector<8x256xi32>
    %16 = arith.extui %15 : vector<8x256xi1> to vector<8x256xi32>
    %17 = arith.sitofp %16 : vector<8x256xi32> to vector<8x256xf32>
    %18 = arith.addf %10, %17 : vector<8x256xf32>
    %19 = arith.truncf %18 : vector<8x256xf32> to vector<8x256xbf16>
    %c0_1 = arith.constant 0 : index
    %c0_2 = arith.constant 0 : index
    %20 = vector.load %arg2[%c0_1, %c0_2] : memref<256x128xbf16, #tpu.memory_space<vmem>>, vector<256x128xbf16>
    %cst_3 = arith.constant dense<0.000000e+00> : vector<8x128xf32>
    %21 = tpu.matmul %19, %20, %cst_3 {dimension_numbers = #tpu.dot_dimension_numbers<[1], [0], [0], [1], [0, 0, 1, 1], [], []>} : vector<8x256xbf16>, vector<256x128xbf16>, vector<8x128xf32> -> vector<8x128xf32>
    %c0_4 = arith.constant 0 : index
    %c0_5 = arith.constant 0 : index
    %22 = vector.load %arg3[%c0_4, %c0_5] : memref<1x128xf32, #tpu.memory_space<vmem>>, vector<1x128xf32>
    %23 = vector.broadcast %22 : vector<1x128xf32> to vector<8x128xf32>
    %24 = arith.addf %21, %23 : vector<8x128xf32>
    %cst_6 = arith.constant 0.000000e+00 : f32
    %25 = vector.broadcast %cst_6 : f32 to vector<8x128xf32>
    %26 = arith.maximumf %24, %25 : vector<8x128xf32>
    %27 = arith.truncf %26 : vector<8x128xf32> to vector<8x128xbf16>
    %c0_7 = arith.constant 0 : index
    %c0_8 = arith.constant 0 : index
    %28 = vector.load %arg4[%c0_7, %c0_8] : memref<128x128xbf16, #tpu.memory_space<vmem>>, vector<128x128xbf16>
    %cst_9 = arith.constant dense<0.000000e+00> : vector<8x128xf32>
    %29 = tpu.matmul %27, %28, %cst_9 {dimension_numbers = #tpu.dot_dimension_numbers<[1], [0], [0], [1], [0, 0, 1, 1], [], []>} : vector<8x128xbf16>, vector<128x128xbf16>, vector<8x128xf32> -> vector<8x128xf32>
    %c0_10 = arith.constant 0 : index
    %c0_11 = arith.constant 0 : index
    %30 = vector.load %arg5[%c0_10, %c0_11] : memref<1x128xf32, #tpu.memory_space<vmem>>, vector<1x128xf32>
    %31 = vector.broadcast %30 : vector<1x128xf32> to vector<8x128xf32>
    %32 = arith.addf %29, %31 : vector<8x128xf32>
    %cst_12 = arith.constant dense<0xFF800000> : vector<8xf32>
    %33 = vector.multi_reduction <maximumf>, %32, %cst_12 [1] : vector<8x128xf32> to vector<8xf32>
    %34 = vector.shape_cast %33 : vector<8xf32> to vector<8x1xf32>
    %35 = vector.broadcast %34 : vector<8x1xf32> to vector<8x128xf32>
    %36 = arith.subf %32, %35 : vector<8x128xf32>
    %37 = math.exp %36 : vector<8x128xf32>
    %cst_13 = arith.constant dense<0.000000e+00> : vector<8xf32>
    %38 = vector.multi_reduction <add>, %37, %cst_13 [1] : vector<8x128xf32> to vector<8xf32>
    %39 = vector.shape_cast %38 : vector<8xf32> to vector<8x1xf32>
    %40 = math.log %39 : vector<8x1xf32>
    %41 = arith.addf %34, %40 : vector<8x1xf32>
    %42 = vector.broadcast %41 : vector<8x1xf32> to vector<8x128xf32>
    %43 = arith.subf %32, %42 : vector<8x128xf32>
    %c0_14 = arith.constant 0 : index
    %c0_15 = arith.constant 0 : index
    %44 = vector.load %arg6[%c0_14, %c0_15] : memref<8x128xf32, #tpu.memory_space<vmem>>, vector<8x128xf32>
    tpu.vector_store %arg6[%c0_14, %c0_15], %43 {strides = array<i32>} : memref<8x128xf32, #tpu.memory_space<vmem>>, vector<8x128xf32>,
    return
  }
  func.func @transform_0(%arg0: i32) -> (i32, i32) {
    %c0_i32 = arith.constant 0 : i32
    %c0_i32_0 = arith.constant 0 : i32
    return %arg0, %c0_i32 : i32, i32
  }
  func.func @transform_1(%arg0: i32) -> (i32, i32) {
    %c0_i32 = arith.constant 0 : i32
    %c0_i32_0 = arith.constant 0 : i32
    %c0_i32_1 = arith.constant 0 : i32
    return %c0_i32, %c0_i32_0 : i32, i32
  }
  func.func @transform_2(%arg0: i32) -> (i32, i32) {
    %c0_i32 = arith.constant 0 : i32
    %c0_i32_0 = arith.constant 0 : i32
    %c0_i32_1 = arith.constant 0 : i32
    return %c0_i32, %c0_i32_0 : i32, i32
  }
  func.func @transform_3(%arg0: i32) -> (i32, i32) {
    %c0_i32 = arith.constant 0 : i32
    %c0_i32_0 = arith.constant 0 : i32
    %c0_i32_1 = arith.constant 0 : i32
    return %c0_i32, %c0_i32_0 : i32, i32
  }
  func.func @transform_4(%arg0: i32) -> (i32, i32) {
    %c0_i32 = arith.constant 0 : i32
    %c0_i32_0 = arith.constant 0 : i32
    %c0_i32_1 = arith.constant 0 : i32
    return %c0_i32, %c0_i32_0 : i32, i32
  }
  func.func @transform_5(%arg0: i32) -> (i32, i32) {
    %c0_i32 = arith.constant 0 : i32
    %c0_i32_0 = arith.constant 0 : i32
    return %arg0, %c0_i32 : i32, i32
  }
}

</mosaic_0001>

<llo_original>
// kernel: ngram_log_probs.1
$region0: #{ngram_log_probs.1}
  #allocation0 [shape = 'u32[]', space=smem, size = 0x4, offset = 0x4, fixed_abs, tag = 'smem constant byte address 0x4 - core index']
  #allocation1 [shape = 'u32[72,128]{1,0:T(1,128)}', space=vmem, size = 0x9000, scoped, tag = 'internal scratch']
  %s0 = inlined_call_operand.vmem [shape: s32[24,2], index: 0, kind: input, shape index: {}]
  %s1 = inlined_call_operand.vmem [shape: bf16[256,128], index: 1, kind: input, shape index: {}]
  %s2 = inlined_call_operand.vmem [shape: f32[1,128], index: 2, kind: input, shape index: {}]
  %s3 = inlined_call_operand.vmem [shape: bf16[128,128], index: 3, kind: input, shape index: {}]
  %s4 = inlined_call_operand.vmem [shape: f32[1,128], index: 4, kind: input, shape index: {}]
  %s5 = inlined_call_operand.hbm [shape: f32[24,128], index: 5, kind: output, shape index: {}]
  %s6 = sld [smem:[#allocation0]]
  $region53: #{ngram_log_probs.1} parent=0
    _
  %s8 = ssub.s32 1, %s6
  %s9 = scalar_select 0, %s8, %s6
  $region1: #{ngram_log_probs.1} parent=0
    #allocation2 [shape = 'u8[8192]{0}', space=vmem, size = 0x2000, scoped, tag = 'output window, operand 0']
    #allocation3 [shape = 's32[2]{0}', space=sflag, size = 0x8, scoped, tag = 'scoped memory for ngram_log_probs.1']
    %10 = vsyncpa [#allocation3], 0
    %s11 = scalar_lea.sflag [#allocation3], 1
    %12 = vsyncpa %s11, 0
    loop: start=0, step=1, limit=5
    $region2: #{ngram_log_probs.1} parent=1 // loop_pre_header
      _
    $region3: #{ngram_log_probs.1} parent=1 // loop_header
      %s14 = sphi 0, %s18
      %p15 = scmp.ge.s32.totalorder %s14, 5
      %s24 = sphi 0, %s26
      %s27 = sphi 0, %s24
      %s28 = sphi 0, %s27
      %s44 = sphi 0, %s28
      %s48 = sphi 0, %s48
      %s50 = sphi 0, %s48
      %s51 = sphi 0, %s50
      %s65 = sphi 0, %s51
      %s69 = sphi 0, %s69
      %s71 = sphi 0, %s69
      %s72 = sphi 0, %s71
      %s86 = sphi 0, %s72
      %s90 = sphi 0, %s90
      %s92 = sphi 0, %s90
      %s93 = sphi 0, %s92
      %s107 = sphi 0, %s93
      %s111 = sphi 0, %s111
      %s113 = sphi 0, %s111
      %s114 = sphi 0, %s113
      %s128 = sphi 0, %s114
      %s134 = sphi 0, %s136
      %s137 = sphi 0, %s134
      %s138 = sphi 0, %s137
      %s154 = sphi 0, %s138
    $region4: #{ngram_log_probs.1} parent=1 // loop_header_branch
      %17 = sbr.rel (%p15) target = $region8
    $region5: #{ngram_log_probs.1} parent=1 // loop_body
      %s19 = ssub.s32 %s14, 1
      %s20 = ssub.s32 %s14, 2
      %s21 = sadd.s32 %s14, 1
      %s22 = ssub.s32 %s14, %s21
      %p23 = scmp.eq.s32.totalorder %s22, 0
      %s25 = sadd.s32 %s24, 1
      %s26 = scalar_select %p23, %s24, %s25
      %p29 = pneg %p23
      %p30 = scmp.eq.s32.totalorder %s14, 2
      %p31 = por %p29, %p30
      %p32 = scmp.ne.s32.totalorder %s24, %s27
      %p33 = scmp.eq.s32.totalorder %s14, 0
      %p34 = por %p32, %p33
      %p35 = scmp.ne.s32.totalorder %s24, %s27
      %p36 = scmp.eq.s32.totalorder %s19, 2
      %p37 = por %p35, %p36
      %p38 = scmp.ne.s32.totalorder %s27, %s28
      %p39 = scmp.eq.s32.totalorder %s19, 0
      %p40 = por %p38, %p39
      %p41 = scmp.ne.s32.totalorder %s27, %s28
      %p42 = scmp.eq.s32.totalorder %s20, 2
      %p43 = por %p41, %p42
      %p45 = scmp.ne.s32.totalorder %s28, %s44
      %p46 = scmp.eq.s32.totalorder %s20, 0
      %p47 = por %p45, %p46
      %s49 = sadd.s32 %s48, 1
      %p52 = scmp.eq.s32.totalorder %s14, 2
      %p53 = scmp.ne.s32.totalorder %s48, %s50
      %p54 = scmp.eq.s32.totalorder %s14, 0
      %p55 = por %p53, %p54
      %p56 = scmp.ne.s32.totalorder %s48, %s50
      %p57 = scmp.eq.s32.totalorder %s19, 2
      %p58 = por %p56, %p57
      %p59 = scmp.ne.s32.totalorder %s50, %s51
      %p60 = scmp.eq.s32.totalorder %s19, 0
      %p61 = por %p59, %p60
      %p62 = scmp.ne.s32.totalorder %s50, %s51
      %p63 = scmp.eq.s32.totalorder %s20, 2
      %p64 = por %p62, %p63
      %p66 = scmp.ne.s32.totalorder %s51, %s65
      %p67 = scmp.eq.s32.totalorder %s20, 0
      %p68 = por %p66, %p67
      %s70 = sadd.s32 %s69, 1
      %p73 = scmp.eq.s32.totalorder %s14, 2
      %p74 = scmp.ne.s32.totalorder %s69, %s71
      %p75 = scmp.eq.s32.totalorder %s14, 0
      %p76 = por %p74, %p75
      %p77 = scmp.ne.s32.totalorder %s69, %s71
      %p78 = scmp.eq.s32.totalorder %s19, 2
      %p79 = por %p77, %p78
      %p80 = scmp.ne.s32.totalorder %s71, %s72
      %p81 = scmp.eq.s32.totalorder %s19, 0
      %p82 = por %p80, %p81
      %p83 = scmp.ne.s32.totalorder %s71, %s72
      %p84 = scmp.eq.s32.totalorder %s20, 2
      %p85 = por %p83, %p84
      %p87 = scmp.ne.s32.totalorder %s72, %s86
      %p88 = scmp.eq.s32.totalorder %s20, 0
      %p89 = por %p87, %p88
      %s91 = sadd.s32 %s90, 1
      %p94 = scmp.eq.s32.totalorder %s14, 2
      %p95 = scmp.ne.s32.totalorder %s90, %s92
      %p96 = scmp.eq.s32.totalorder %s14, 0
      %p97 = por %p95, %p96
      %p98 = scmp.ne.s32.totalorder %s90, %s92
      %p99 = scmp.eq.s32.totalorder %s19, 2
      %p100 = por %p98, %p99
      %p101 = scmp.ne.s32.totalorder %s92, %s93
      %p102 = scmp.eq.s32.totalorder %s19, 0
      %p103 = por %p101, %p102
      %p104 = scmp.ne.s32.totalorder %s92, %s93
      %p105 = scmp.eq.s32.totalorder %s20, 2
      %p106 = por %p104, %p105
      %p108 = scmp.ne.s32.totalorder %s93, %s107
      %p109 = scmp.eq.s32.totalorder %s20, 0
      %p110 = por %p108, %p109
      %s112 = sadd.s32 %s111, 1
      %p115 = scmp.eq.s32.totalorder %s14, 2
      %p116 = scmp.ne.s32.totalorder %s111, %s113
      %p117 = scmp.eq.s32.totalorder %s14, 0
      %p118 = por %p116, %p117
      %p119 = scmp.ne.s32.totalorder %s111, %s113
      %p120 = scmp.eq.s32.totalorder %s19, 2
      %p121 = por %p119, %p120
      %p122 = scmp.ne.s32.totalorder %s113, %s114
      %p123 = scmp.eq.s32.totalorder %s19, 0
      %p124 = por %p122, %p123
      %p125 = scmp.ne.s32.totalorder %s113, %s114
      %p126 = scmp.eq.s32.totalorder %s20, 2
      %p127 = por %p125, %p126
      %p129 = scmp.ne.s32.totalorder %s114, %s128
      %p130 = scmp.eq.s32.totalorder %s20, 0
      %p131 = por %p129, %p130
      %s132 = ssub.s32 %s14, %s21
      %p133 = scmp.eq.s32.totalorder %s132, 0
      %s135 = sadd.s32 %s134, 1
      %s136 = scalar_select %p133, %s134, %s135
      %p139 = pneg %p133
      %p140 = scmp.eq.s32.totalorder %s14, 2
      %p141 = por %p139, %p140
      %p142 = scmp.ne.s32.totalorder %s134, %s137
      %p143 = scmp.eq.s32.totalorder %s14, 0
      %p144 = por %p142, %p143
      %p145 = scmp.ne.s32.totalorder %s134, %s137
      %p146 = scmp.eq.s32.totalorder %s19, 2
      %p147 = por %p145, %p146
      %p148 = scmp.ne.s32.totalorder %s137, %s138
      %p149 = scmp.eq.s32.totalorder %s19, 0
      %p150 = por %p148, %p149
      %p151 = scmp.ne.s32.totalorder %s137, %s138
      %p152 = scmp.eq.s32.totalorder %s20, 2
      %p153 = por %p151, %p152
      %p155 = scmp.ne.s32.totalorder %s138, %s154
      %p156 = scmp.eq.s32.totalorder %s20, 0
      %p157 = por %p155, %p156
      %p158 = scmp.le.s32.totalorder 1, %s14
      %p159 = scmp.lt.s32.totalorder %s14, 4
      %p160 = pnand %p158, %p159
      %p161 = pneg %p160
      // Predicated region
      $region9: #{ngram_log_probs.1} parent=5 // pred_check
        _
      $region10: #{ngram_log_probs.1} parent=5 // pred_check_branch
        %163 = sbr.rel (%p160) target = $region12
      $region11: #{ngram_log_probs.1} parent=5 // pred_region
        %s164 = ssub.s32 %s14, 1
        // Predicated region
        $region13: #{ngram_log_probs.1} parent=11 // pred_check
          %p165 = pneg %p61
        $region14: #{ngram_log_probs.1} parent=11 // pred_check_branch
          %167 = sbr.rel (%p165) target = $region16
        $region15: #{ngram_log_probs.1} parent=11 // pred_region
          _
        $region16: #{ngram_log_probs.1} parent=11 // pred_fallthru
          _
        // Predicated region
        $region17: #{ngram_log_probs.1} parent=11 // pred_check
          %p168 = pneg %p82
        $region18: #{ngram_log_probs.1} parent=11 // pred_check_branch
          %170 = sbr.rel (%p168) target = $region20
        $region19: #{ngram_log_probs.1} parent=11 // pred_region
          _
        $region20: #{ngram_log_probs.1} parent=11 // pred_fallthru
          _
        // Predicated region
        $region21: #{ngram_log_probs.1} parent=11 // pred_check
          %p171 = pneg %p103
        $region22: #{ngram_log_probs.1} parent=11 // pred_check_branch
          %173 = sbr.rel (%p171) target = $region24
        $region23: #{ngram_log_probs.1} parent=11 // pred_region
          _
        $region24: #{ngram_log_probs.1} parent=11 // pred_fallthru
          _
        // Predicated region
        $region25: #{ngram_log_probs.1} parent=11 // pred_check
          %p174 = pneg %p124
        $region26: #{ngram_log_probs.1} parent=11 // pred_check_branch
          %176 = sbr.rel (%p174) target = $region28
        $region27: #{ngram_log_probs.1} parent=11 // pred_region
          _
        $region28: #{ngram_log_probs.1} parent=11 // pred_fallthru
          _
      $region12: #{ngram_log_probs.1} parent=5 // pred_fallthru
        _
      %p177 = scmp.lt.s32.totalorder %s14, 3
      // Predicated region
      $region29: #{ngram_log_probs.1} parent=5 // pred_check
        %p178 = pneg %p177
      $region30: #{ngram_log_probs.1} parent=5 // pred_check_branch
        %180 = sbr.rel (%p178) target = $region32
      $region31: #{ngram_log_probs.1} parent=5 // pred_region
        // Predicated region
        $region33: #{ngram_log_probs.1} parent=31 // pred_check
          %p181 = pneg %p34
        $region34: #{ngram_log_probs.1} parent=31 // pred_check_branch
          %183 = sbr.rel (%p181) target = $region36
        $region35: #{ngram_log_probs.1} parent=31 // pred_region
          %p184 = scmp.lt.s32.totalorder %s14, 2
          %s185 = scalar_select %p184, %s14, 2
          %s186 = smul.addr %s185, 8
          %s187 = scalar_lea.vmem %s0, %s186
        $region36: #{ngram_log_probs.1} parent=31 // pred_fallthru
          _
      $region32: #{ngram_log_probs.1} parent=5 // pred_fallthru
        _
      %p188 = scmp.le.s32.totalorder 1, %s14
      %p189 = scmp.lt.s32.totalorder %s14, 4
      %p190 = pnand %p188, %p189
      %p191 = pneg %p190
      // Predicated region
      $region37: #{ngram_log_probs.1} parent=5 // pred_check
        _
      $region38: #{ngram_log_probs.1} parent=5 // pred_check_branch
        %193 = sbr.rel (%p190) target = $region40
      $region39: #{ngram_log_probs.1} parent=5 // pred_region
        %s194 = ssub.s32 %s14, 1
        %p195 = scmp.lt.s32.totalorder %s19, 2
        %s196 = scalar_select %p195, %s19, 2
        %s197 = smul.addr %s196, 8
        %s198 = scalar_lea.vmem %s0, %s197
        %p199 = pneg %p40
        %p200 = pneg %p37
        %p201 = pneg %p61
        %p202 = pneg %p58
        %p203 = pneg %p82
        %p204 = pneg %p79
        %p205 = pneg %p103
        %p206 = pneg %p100
        %p207 = pneg %p124
        %p208 = pneg %p121
        %p209 = pneg %p150
        %p210 = pneg %p147
        %s211 = sand.u32 %s137, 1
        %s212 = scalar_lea.sflag [#allocation3], %s211
        %s213 = sand.u32 %s137, 1
        %s214 = smul.addr %s213, 8
        %s215 = scalar_lea.vmem [#allocation2], %s214
        %p216 = scmp.lt.s32.totalorder %s19, 2
        %s217 = scalar_select %p216, %s19, 2
        %s218 = smul.addr %s217, 8
        %s219 = scalar_lea.vmem %s0, %s218
        %v220 = vld [vmem:[%s219] sm:$0xff]
        %v221 = vlaneseq
        %v222 = vand.u32 %v221, 127
        %v223 = vadd.s32 %v222, 128
        %224 = vset.pattern.permute.xlu0 0
        %225 = vperm.xlu0 %224, %v220
        %v226 = vpop.permute.xlu0 %225
        %vm227 = vcmp.eq.s32.totalorder %v222, %v226
        %vm228 = vcmp.eq.s32.totalorder %v223, %v226
        %v229 = vsel %vm227, 1, 0
        %v230 = vsel %vm228, 1, 0
        %v231 = vcvt.s32.f32 %v229
        %v232 = vcvt.s32.f32 %v230
        %v233 = vadd.f32 %v231, 0.0
        %v234 = vadd.f32 %v232, 0.0
        %v235 = vadd.s32 %v220, 128
        %236 = vset.pattern.permute.xlu0 1
        %237 = vperm.xlu0 %236, %v235
        %v238 = vpop.permute.xlu0 %237
        %vm239 = vcmp.eq.s32.totalorder %v222, %v238
        %vm240 = vcmp.eq.s32.totalorder %v223, %v238
        %v241 = vsel %vm239, 1, 0
        %v242 = vsel %vm240, 1, 0
        %v243 = vcvt.s32.f32 %v241
        %v244 = vcvt.s32.f32 %v242
        %v245 = vadd.f32 %v233, %v243
        %v246 = vadd.f32 %v234, %v244
        %v247 = vpack.c.bf16 %v245, %v245
        %v248 = vpack.c.bf16 %v246, %v246
        %v249 = vld [vmem:[%s1] sm:$0xf]
        %v250 = vld [vmem:[%s1 + $0x4] sm:$0xf]
        %v251 = vld [vmem:[%s1 + $0x8] sm:$0xf]
        %v252 = vld [vmem:[%s1 + $0xc] sm:$0xf]
        %v253 = vld [vmem:[%s1 + $0x10] sm:$0xf]
        %v254 = vld [vmem:[%s1 + $0x14] sm:$0xf]
        %v255 = vld [vmem:[%s1 + $0x18] sm:$0xf]
        %v256 = vld [vmem:[%s1 + $0x1c] sm:$0xf]
        %v257 = vld [vmem:[%s1 + $0x20] sm:$0xf]
        %v258 = vld [vmem:[%s1 + $0x24] sm:$0xf]
        %v259 = vld [vmem:[%s1 + $0x28] sm:$0xf]
        %v260 = vld [vmem:[%s1 + $0x2c] sm:$0xf]
        %v261 = vld [vmem:[%s1 + $0x30] sm:$0xf]
        %v262 = vld [vmem:[%s1 + $0x34] sm:$0xf]
        %v263 = vld [vmem:[%s1 + $0x38] sm:$0xf]
        %v264 = vld [vmem:[%s1 + $0x3c] sm:$0xf]
        %v265 = vld [vmem:[%s1 + $0x40] sm:$0xf]
        %v266 = vld [vmem:[%s1 + $0x44] sm:$0xf]
        %v267 = vld [vmem:[%s1 + $0x48] sm:$0xf]
        %v268 = vld [vmem:[%s1 + $0x4c] sm:$0xf]
        %v269 = vld [vmem:[%s1 + $0x50] sm:$0xf]
        %v270 = vld [vmem:[%s1 + $0x54] sm:$0xf]
        %v271 = vld [vmem:[%s1 + $0x58] sm:$0xf]
        %v272 = vld [vmem:[%s1 + $0x5c] sm:$0xf]
        %v273 = vld [vmem:[%s1 + $0x60] sm:$0xf]
        %v274 = vld [vmem:[%s1 + $0x64] sm:$0xf]
        %v275 = vld [vmem:[%s1 + $0x68] sm:$0xf]
        %v276 = vld [vmem:[%s1 + $0x6c] sm:$0xf]
        %v277 = vld [vmem:[%s1 + $0x70] sm:$0xf]
        %v278 = vld [vmem:[%s1 + $0x74] sm:$0xf]
        %v279 = vld [vmem:[%s1 + $0x78] sm:$0xf]
        %v280 = vld [vmem:[%s1 + $0x7c] sm:$0xf]
        %v281 = vld [vmem:[%s2] sm:$0x1]
        %v283 = vperm.slane %v281, 0
        %v317 = vunpack.c.l.b16 %v249
        %v318 = vunpack.c.l.b16 %v250
        %v319 = vunpack.c.l.b16 %v251
        %v320 = vunpack.c.l.b16 %v252
        %v321 = vunpack.c.l.b16 %v253
        %v322 = vunpack.c.l.b16 %v254
        %v323 = vunpack.c.l.b16 %v255
        %v324 = vunpack.c.l.b16 %v256
        %v325 = vunpack.c.l.b16 %v257
        %v326 = vunpack.c.l.b16 %v258
        %v327 = vunpack.c.l.b16 %v259
        %v328 = vunpack.c.l.b16 %v260
        %v329 = vunpack.c.l.b16 %v261
        %v330 = vunpack.c.l.b16 %v262
        %v331 = vunpack.c.l.b16 %v263
        %v332 = vunpack.c.l.b16 %v264
        %v333 = vunpack.c.l.b16 %v265
        %v334 = vunpack.c.l.b16 %v266
        %v335 = vunpack.c.l.b16 %v267
        %v336 = vunpack.c.l.b16 %v268
        %v337 = vunpack.c.l.b16 %v269
        %v338 = vunpack.c.l.b16 %v270
        %v339 = vunpack.c.l.b16 %v271
        %v340 = vunpack.c.l.b16 %v272
        %v341 = vunpack.c.l.b16 %v273
        %v342 = vunpack.c.l.b16 %v274
        %v343 = vunpack.c.l.b16 %v275
        %v344 = vunpack.c.l.b16 %v276
        %v345 = vunpack.c.l.b16 %v277
        %v346 = vunpack.c.l.b16 %v278
        %v347 = vunpack.c.l.b16 %v279
        %v348 = vunpack.c.l.b16 %v280
        %v349 = vpack.c.b16 %v318, %v317
        %v350 = vpack.c.b16 %v320, %v319
        %v351 = vpack.c.b16 %v322, %v321
        %v352 = vpack.c.b16 %v324, %v323
        %v353 = vpack.c.b16 %v326, %v325
        %v354 = vpack.c.b16 %v328, %v327
        %v355 = vpack.c.b16 %v330, %v329
        %v356 = vpack.c.b16 %v332, %v331
        %v357 = vpack.c.b16 %v334, %v333
        %v358 = vpack.c.b16 %v336, %v335
        %v359 = vpack.c.b16 %v338, %v337
        %v360 = vpack.c.b16 %v340, %v339
        %v361 = vpack.c.b16 %v342, %v341
        %v362 = vpack.c.b16 %v344, %v343
        %v363 = vpack.c.b16 %v346, %v345
        %v364 = vpack.c.b16 %v348, %v347
        %381 = vmatpush.bf16.msra.mxu0 %v356
        %382 = vmatpush.bf16.msra.mxu0 %v355
        %383 = vmatpush.bf16.msra.mxu0 %v354
        %384 = vmatpush.bf16.msra.mxu0 %v353
        %385 = vmatpush.bf16.msra.mxu0 %v352
        %386 = vmatpush.bf16.msra.mxu0 %v351
        %387 = vmatpush.bf16.msra.mxu0 %v350
        %388 = vmatpush.bf16.msra.mxu0 %v349
        %389 = vmatmul.bf16.gmra.mxu0 %v247
        %v390 = vpop.f32.mrf.mxu0
        %v391 = vadd.f32 %v283, %v390
        %v392 = vpop.f32.mrf.mxu0
        %393 = vdwg.mxu0
        %394 = vmatpush.bf16.msra.mxu0 %v364
        %395 = vmatpush.bf16.msra.mxu0 %v363
        %396 = vmatpush.bf16.msra.mxu0 %v362
        %397 = vmatpush.bf16.msra.mxu0 %v361
        %398 = vmatpush.bf16.msra.mxu0 %v360
        %399 = vmatpush.bf16.msra.mxu0 %v359
        %400 = vmatpush.bf16.msra.mxu0 %v358
        %401 = vmatpush.bf16.msra.mxu0 %v357
        %402 = vmatmul.bf16.gmra.mxu0 %v248
        %v403 = vpop.f32.mrf.mxu0
        %v404 = vadd.f32 %v391, %v403
        %v405 = vpop.f32.mrf.mxu0
        %406 = vdwg.mxu0
        %v407 = vmax.f32 %v404, 0.0
        %v408 = vpack.c.bf16 %v407, %v407
        %v409 = vld [vmem:[%s3] sm:$0xf]
        %v410 = vld [vmem:[%s3 + $0x4] sm:$0xf]
        %v411 = vld [vmem:[%s3 + $0x8] sm:$0xf]
        %v412 = vld [vmem:[%s3 + $0xc] sm:$0xf]
        %v413 = vld [vmem:[%s3 + $0x10] sm:$0xf]
        %v414 = vld [vmem:[%s3 + $0x14] sm:$0xf]
        %v415 = vld [vmem:[%s3 + $0x18] sm:$0xf]
        %v416 = vld [vmem:[%s3 + $0x1c] sm:$0xf]
        %v417 = vld [vmem:[%s3 + $0x20] sm:$0xf]
        %v418 = vld [vmem:[%s3 + $0x24] sm:$0xf]
        %v419 = vld [vmem:[%s3 + $0x28] sm:$0xf]
        %v420 = vld [vmem:[%s3 + $0x2c] sm:$0xf]
        %v421 = vld [vmem:[%s3 + $0x30] sm:$0xf]
        %v422 = vld [vmem:[%s3 + $0x34] sm:$0xf]
        %v423 = vld [vmem:[%s3 + $0x38] sm:$0xf]
        %v424 = vld [vmem:[%s3 + $0x3c] sm:$0xf]
        %v425 = vld [vmem:[%s4] sm:$0x1]
        %v427 = vperm.slane %v425, 0
        %v445 = vunpack.c.l.b16 %v409
        %v446 = vunpack.c.l.b16 %v410
        %v447 = vunpack.c.l.b16 %v411
        %v448 = vunpack.c.l.b16 %v412
        %v449 = vunpack.c.l.b16 %v413
        %v450 = vunpack.c.l.b16 %v414
        %v451 = vunpack.c.l.b16 %v415
        %v452 = vunpack.c.l.b16 %v416
        %v453 = vunpack.c.l.b16 %v417
        %v454 = vunpack.c.l.b16 %v418
        %v455 = vunpack.c.l.b16 %v419
        %v456 = vunpack.c.l.b16 %v420
        %v457 = vunpack.c.l.b16 %v421
        %v458 = vunpack.c.l.b16 %v422
        %v459 = vunpack.c.l.b16 %v423
        %v460 = vunpack.c.l.b16 %v424
        %v461 = vpack.c.b16 %v446, %v445
        %v462 = vpack.c.b16 %v448, %v447
        %v463 = vpack.c.b16 %v450, %v449
        %v464 = vpack.c.b16 %v452, %v451
        %v465 = vpack.c.b16 %v454, %v453
        %v466 = vpack.c.b16 %v456, %v455
        %v467 = vpack.c.b16 %v458, %v457
        %v468 = vpack.c.b16 %v460, %v459
        %477 = vmatpush.bf16.msra.mxu0 %v468
        %478 = vmatpush.bf16.msra.mxu0 %v467
        %479 = vmatpush.bf16.msra.mxu0 %v466
        %480 = vmatpush.bf16.msra.mxu0 %v465
        %481 = vmatpush.bf16.msra.mxu0 %v464
        %482 = vmatpush.bf16.msra.mxu0 %v463
        %483 = vmatpush.bf16.msra.mxu0 %v462
        %484 = vmatpush.bf16.msra.mxu0 %v461
        %485 = vmatmul.bf16.gmra.mxu0 %v408
        %v486 = vpop.f32.mrf.mxu0
        %v487 = vadd.f32 %v427, %v486
        %v488 = vpop.f32.mrf.mxu0
        %489 = vdwg.mxu0
        %490 = vmax.xlane.f32.xlu0 %v487
        %v491 = vpop.xlane.xlu0 %490
        %v492 = vsub.f32 %v487, %v491
        %v493 = vmul.f32 %v492, 1.442695
        %v494 = vpow.pop %v493
        %495 = vadd.xlane.f32.xlu0 %v494
        %v496 = vpop.xlane.xlu0 %495
        %v497 = vlog2.pop %v496
        %v498 = vmul.f32 %v497, 0.6931472
        %v499 = vadd.f32 %v491, %v498
        %v500 = vsub.f32 %v487, %v499
        %501 = vst [vmem:[%s215] sm:$0xff] %v500
        %s502 = sand.u32 %s137, 1
        %s503 = scalar_lea.sflag [#allocation3], %s502
        %s504 = sand.u32 %s137, 1
        %s505 = smul.addr %s504, 8
        %s506 = scalar_lea.vmem [#allocation2], %s505
        // Predicated region
        $region41: #{ngram_log_probs.1} parent=39 // pred_check
          %p507 = pneg %p147
        $region42: #{ngram_log_probs.1} parent=39 // pred_check_branch
          %509 = sbr.rel (%p507) target = $region44
        $region43: #{ngram_log_probs.1} parent=39 // pred_region
          %511 = vsyncadd %s503, 0
          %s512 = smul.addr %s19, 8
          %s513 = scalar_lea.hbm %s5, %s512
          %s515 = sshll.u32 %s506, 4
          %s516 = int_to_ptr.vmem [resolvable:$true] %s515
          %s517 = sshll.u32 %s513, 4
          %s518 = int_to_ptr.hbm [resolvable:$true] %s517
          %520 = dma.vmem_to_hbm [thread:$0]  %s516, 128, %s518, %s503
        $region44: #{ngram_log_probs.1} parent=39 // pred_fallthru
          _
      $region40: #{ngram_log_probs.1} parent=5 // pred_fallthru
        _
      %p521 = scmp.le.s32.totalorder 2, %s14
      // Predicated region
      $region45: #{ngram_log_probs.1} parent=5 // pred_check
        %p522 = pneg %p521
      $region46: #{ngram_log_probs.1} parent=5 // pred_check_branch
        %524 = sbr.rel (%p522) target = $region48
      $region47: #{ngram_log_probs.1} parent=5 // pred_region
        %s525 = ssub.s32 %s14, 2
        // Predicated region
        $region49: #{ngram_log_probs.1} parent=47 // pred_check
          %p526 = pneg %p153
        $region50: #{ngram_log_probs.1} parent=47 // pred_check_branch
          %528 = sbr.rel (%p526) target = $region52
        $region51: #{ngram_log_probs.1} parent=47 // pred_region
          %s529 = sand.u32 %s138, 1
          %s530 = scalar_lea.sflag [#allocation3], %s529
          %s531 = sand.u32 %s138, 1
          %s532 = smul.addr %s531, 8
          %s533 = scalar_lea.vmem [#allocation2], %s532
          %535 = dma.done %s530, 128
        $region52: #{ngram_log_probs.1} parent=47 // pred_fallthru
          _
      $region48: #{ngram_log_probs.1} parent=5 // pred_fallthru
        _
    $region6: #{ngram_log_probs.1} parent=1 // loop_footer
      %s18 = sadd.s32 1, %s14
    $region7: #{ngram_log_probs.1} parent=1 // loop_footer_branch
      %13 = sbr.rel target = $region3
    $region8: #{ngram_log_probs.1} parent=1 // loop_exit
      _
    %536 = vsyncpa [#allocation3], 1
    %s537 = scalar_lea.sflag [#allocation3], 1
    %538 = vsyncpa %s537, 1

</llo_original>
